<compile_context>
chip_gen: v7x
topology: tpu7x:2x2x1
jax: 0.10.0
libtpu: 0.0.40
codegen_flags: <defaults>
</compile_context>

<pallas_src>
import functools
import math

import jax
import jax.numpy as jnp
from jax import lax
from jax.experimental import pallas as pl
from jax.experimental.pallas import tpu as pltpu


# ---------------------------------------------------------------------------
# Hardware-aware defaults
# ---------------------------------------------------------------------------

def _device_kind():
    try:
        return jax.devices()[0].device_kind.lower()
    except Exception:
        return ""


def _vmem_capacity_bytes():
    try:
        return int(pltpu.get_tpu_info().vmem_capacity_bytes)
    except Exception:
        kind = _device_kind()
        if "v5" in kind or "v6" in kind:
            return 128 << 20
        return 64 << 20            # conservative default (v7x per-TC VMEM)


def _default_block_tokens():
    # v6e/v7x MXUs are 256-wide -> T=256 fills the systolic M dimension and
    # halves the number of ~0.35us grid steps; v5e's 128-wide MXU is already
    # saturated at T=128.
    return 128 if "v5" in _device_kind() else 256


def _onehot_max_vocab():
    # The one-hot gather is a "fake matmul": a few VPU passes over (T, vocab)
    # plus a vocab-deep MXU contraction per (T, d_model) of useful output, so it
    # only pays for small vocabs.  v6e tolerates a larger cutoff; v5e (weak f32
    # VPU, 128-wide MXU) and v7x (HBM fast enough that the DMA gather is nearly
    # free) want a smaller one.
    return 1024 if "v6" in _device_kind() else 512


def _pick_block_tokens(n, max_blk):
    """Token block size: multiple of 8; prefer a divisor of n so no padding is
    needed (padding forces a post-kernel slice == a second full-output copy)."""
    if n <= max_blk:
        return max(8, ((n + 7) // 8) * 8)
    if n % 8 == 0:
        d = (max_blk // 8) * 8
        while d >= max(8, max_blk // 2):
            if n % d == 0:
                return d
            d -= 8
    return max(8, (max_blk // 8) * 8)


# ---------------------------------------------------------------------------
# Kernels
# ---------------------------------------------------------------------------

def _embed_onehot_kernel(ids_ref, table_ref, out_ref, *, scale):
    # ids_ref:   VMEM (1, T, 1) int32   (ids oriented along sublanes)
    # table_ref: VMEM (vocab, d_model)  (constant block index -> resident)
    # out_ref:   VMEM (T, d_model)
    ids = ids_ref[0]                                   # (T, 1) int32
    t = ids.shape[0]
    vocab = table_ref.shape[0]
    # one_hot[t, v] = scale if v == ids[t] else 0  -- (T, vocab), vocab on lanes.
    # Folding the sqrt(d_model) scale here removes a (T, d_model) VPU multiply.
    iota_v = lax.broadcasted_iota(jnp.int32, (t, vocab), 1)
    one_hot = jnp.where(iota_v == ids, scale, 0.0).astype(table_ref.dtype)
    # Natural lhs-last x rhs-first contraction -> MXU, f32 accumulation.
    out_ref[...] = jnp.dot(
        one_hot, table_ref[...], preferred_element_type=jnp.float32
    ).astype(out_ref.dtype)


def _embed_dma_gather_kernel(ids_smem, table_hbm, out_ref, rows, sems, *,
                             scale, block_tokens):
    # ids_smem:  SMEM (chunk_tokens,) int32 (scalar prefetch)
    # table_hbm: raw HBM ref (vocab, d_model)  (memory_space=pl.ANY)
    # out_ref:   VMEM (T, d_model)
    # rows:      VMEM scratch (T, d_model), table dtype
    # sems:      DMA semaphores (T,)
    base = pl.program_id(0) * block_tokens

    # Issue all T row copies first so they are all in flight concurrently.
    @pl.loop(0, block_tokens)
    def _issue(t):
        idx = ids_smem[base + t]
        pltpu.make_async_copy(table_hbm.at[pl.ds(idx, 1), :],
                              rows.at[pl.ds(t, 1), :],
                              sems.at[t]).start()

    @pl.loop(0, block_tokens)
    def _wait(t):
        pltpu.make_async_copy(table_hbm.at[pl.ds(0, 1), :],
                              rows.at[pl.ds(t, 1), :],
                              sems.at[t]).wait()

    # One dense, unmasked (T, d_model) store.
    out_ref[...] = (rows[...].astype(jnp.float32) * scale).astype(out_ref.dtype)


# ---------------------------------------------------------------------------
# Wrapper
# ---------------------------------------------------------------------------

def embeddings_forward(x_ids, table, d_model=None, *, block_tokens=None):
    """Pallas TPU equivalent of Embeddings.forward: lut(x) * sqrt(d_model).

    x_ids: integer token ids, any shape; table: [vocab, d_model].
    Returns x_ids.shape + (d_model,) in table.dtype.
    """
    vocab, dm = table.shape
    if d_model is None:
        d_model = dm
    assert dm == d_model
    scale = float(math.sqrt(d_model))
    dt_size = table.dtype.itemsize

    lead_shape = x_ids.shape
    n = int(math.prod(lead_shape)) if lead_shape else 1
    # Clip ids (guards both the one-hot compare and the HBM row DMA against OOB).
    ids_flat = jnp.clip(x_ids.reshape(n).astype(jnp.int32), 0, vocab - 1)

    # ---- path choice (generation-aware) -----------------------------------
    vmem_cap = _vmem_capacity_bytes()
    vmem_budget = int(0.75 * vmem_cap)
    default_blk = _default_block_tokens()
    blk_onehot = block_tokens if block_tokens is not None else default_blk
    blk_onehot = max(8, (blk_onehot // 8) * 8)

    table_bytes = vocab * d_model * dt_size
    # Assume the "resident" table BlockSpec may be double-buffered + double-
    # buffered out/ids blocks + the (T, vocab) iota/one-hot temporaries.
    onehot_need = (2 * table_bytes
                   + 2 * blk_onehot * d_model * dt_size
                   + blk_onehot * vocab * (8 + dt_size)
                   + (2 << 20))
    use_onehot = (vocab <= _onehot_max_vocab()) and (onehot_need <= vmem_budget)

    # ---- block size --------------------------------------------------------
    if use_onehot:
        max_blk = blk_onehot
    else:
        # Gather path: 128 rows/step already gives plenty of DMA concurrency and
        # dense stores; keeps the outstanding-DMA / semaphore count modest.
        max_blk = block_tokens if block_tokens is not None else min(default_blk, 128)
        max_blk = max(8, (max_blk // 8) * 8)
    t_blk = _pick_block_tokens(n, max_blk)
    n_pad = ((n + t_blk - 1) // t_blk) * t_blk
    if n_pad != n:
        ids_flat = jnp.pad(ids_flat, (0, n_pad - n))   # pad with id 0 (valid row)

    out_blk_bytes = t_blk * d_model * dt_size
    if use_onehot:
        need = (2 * table_bytes + 2 * out_blk_bytes
                + t_blk * vocab * (8 + dt_size) + (2 << 20))
    else:
        need = 3 * out_blk_bytes + (2 << 20)
    vmem_limit = int(min(max(need + (8 << 20), 32 << 20), int(0.9 * vmem_cap)))

    compiler_params = pltpu.CompilerParams(
        dimension_semantics=("parallel",),   # independent token blocks (both TCs on v7x)
        vmem_limit_bytes=vmem_limit,
    )

    if use_onehot:
        nb = n_pad // t_blk
        ids_blk = ids_flat.reshape(nb, t_blk, 1)   # ids along sublanes in-kernel
        grid_spec = pltpu.PrefetchScalarGridSpec(
            num_scalar_prefetch=0,
            grid=(nb,),
            in_specs=[
                pl.BlockSpec((1, t_blk, 1), lambda i: (i, 0, 0)),
                # Constant block index -> table DMA'd once, resident across steps.
                pl.BlockSpec((vocab, d_model), lambda i: (0, 0)),
            ],
            out_specs=pl.BlockSpec((t_blk, d_model), lambda i: (i, 0)),
        )
        out_flat = pl.pallas_call(
            functools.partial(_embed_onehot_kernel, scale=scale),
            out_shape=jax.ShapeDtypeStruct((n_pad, d_model), table.dtype),
            grid_spec=grid_spec,
            compiler_params=compiler_params,
        )(ids_blk, table)
    else:
        # Data-dependent DMA row gather; the table never needs to fit in VMEM.
        # Chunk the ids across pallas_calls so the SMEM scalar-prefetch buffer
        # (pads to next_pow2(4N) bytes) stays bounded for very long sequences.
        max_tokens_per_call = max(t_blk, (32768 // t_blk) * t_blk)
        kernel = functools.partial(_embed_dma_gather_kernel, scale=scale,
                                   block_tokens=t_blk)
        chunks = []
        for s in range(0, n_pad, max_tokens_per_call):
            c = min(max_tokens_per_call, n_pad - s)
            ids_c = ids_flat[s:s + c]
            grid_spec = pltpu.PrefetchScalarGridSpec(
                num_scalar_prefetch=1,
                grid=(c // t_blk,),
                in_specs=[pl.BlockSpec(memory_space=pl.ANY)],     # table stays in HBM
                out_specs=pl.BlockSpec((t_blk, d_model), lambda i, ids: (i, 0)),
                scratch_shapes=[
                    pltpu.VMEM((t_blk, d_model), table.dtype),
                    pltpu.SemaphoreType.DMA((t_blk,)),
                ],
            )
            chunks.append(pl.pallas_call(
                kernel,
                out_shape=jax.ShapeDtypeStruct((c, d_model), table.dtype),
                grid_spec=grid_spec,
                compiler_params=compiler_params,
            )(ids_c, table))
        out_flat = chunks[0] if len(chunks) == 1 else jnp.concatenate(chunks, axis=0)

    if n_pad != n:
        # Only hit when no nice divisor block exists; otherwise skipped so the
        # memory-bound op does not pay for a second full-output copy.
        out_flat = out_flat[:n]
    return out_flat.reshape(*lead_shape, d_model)


# ---------------------------------------------------------------------------
# Demo / self-test
# ---------------------------------------------------------------------------

if __name__ == "__main__":
    key = jax.random.PRNGKey(0)
    k_tab, k_ids, k_tab2, k_ids2 = jax.random.split(key, 4)

    # --- Small-vocab (one-hot / MXU) path: vocab=64, d_model=128, B=2, S=8 ---
    vocab, d_model = 64, 128
    B, S = 2, 8
    table = jax.random.normal(k_tab, (vocab, d_model), dtype=jnp.float32)
    x_ids = jax.random.randint(k_ids, (B, S), 0, vocab, dtype=jnp.int32)
    out = jax.block_until_ready(embeddings_forward(x_ids, table, d_model))
    ref = jnp.take(table, x_ids, axis=0) * jnp.float32(math.sqrt(d_model))
    assert out.shape == (B, S, d_model)
    assert jnp.allclose(out, ref, atol=1e-4, rtol=1e-4), "one-hot path mismatch"

    # --- Larger-vocab (HBM DMA row-gather) path: vocab=4096, d_model=256 ---
    vocab2, d_model2 = 4096, 256
    B2, S2 = 2, 12
    table2 = jax.random.normal(k_tab2, (vocab2, d_model2), dtype=jnp.float32)
    x_ids2 = jax.random.randint(k_ids2, (B2, S2), 0, vocab2, dtype=jnp.int32)
    out2 = jax.block_until_ready(embeddings_forward(x_ids2, table2, d_model2))
    ref2 = jnp.take(table2, x_ids2, axis=0) * jnp.float32(math.sqrt(d_model2))
    assert out2.shape == (B2, S2, d_model2)
    assert jnp.allclose(out2, ref2, atol=1e-4, rtol=1e-4), "DMA gather path mismatch"

    print("KERNEL_OK")
</pallas_src>

<mosaic_0001>
module attributes {stable_mosaic.version = 11 : i64} {
  func.func @_embed_onehot_kernel(%arg0: i32, %arg1: memref<1x16x1xi32, #tpu.memory_space<vmem>>, %arg2: memref<64x128xf32, #tpu.memory_space<vmem>>, %arg3: memref<16x128xf32, #tpu.memory_space<vmem>>) attributes {dimension_semantics = [#tpu.dimension_semantics<parallel>], iteration_bounds = array<i64: 1>, scalar_prefetch = 0 : i64, scratch_operands = 0 : i64, tpu.core_type = #tpu.core_type<tc>, window_params = [{transform_indices = @transform_0, window_bounds = array<i64: 1, 16, 1>}, {pipeline_mode = #tpu.pipeline_mode<synchronous>, transform_indices = @transform_1, window_bounds = array<i64: 64, 128>}, {transform_indices = @transform_2, window_bounds = array<i64: 16, 128>}]} {
    %c0 = arith.constant 0 : index
    %c0_0 = arith.constant 0 : index
    %c0_1 = arith.constant 0 : index
    %0 = vector.load %arg1[%c0, %c0_0, %c0_1] : memref<1x16x1xi32, #tpu.memory_space<vmem>>, vector<1x16x1xi32>
    %1 = vector.shape_cast %0 : vector<1x16x1xi32> to vector<16x1xi32>
    %2 = tpu.iota {dimensions = array<i32: 1>} : vector<16x64xi32>
    %3 = vector.broadcast %1 : vector<16x1xi32> to vector<16x64xi32>
    %4 = arith.cmpi eq, %2, %3 : vector<16x64xi32>
    %cst = arith.constant 11.3137083 : f32
    %cst_2 = arith.constant 0.000000e+00 : f32
    %5 = vector.broadcast %cst : f32 to vector<16x64xf32>
    %6 = vector.broadcast %cst_2 : f32 to vector<16x64xf32>
    %7 = arith.select %4, %5, %6 : vector<16x64xi1>, vector<16x64xf32>
    %c0_3 = arith.constant 0 : index
    %c0_4 = arith.constant 0 : index
    %8 = vector.load %arg2[%c0_3, %c0_4] : memref<64x128xf32, #tpu.memory_space<vmem>>, vector<64x128xf32>
    %cst_5 = arith.constant dense<0.000000e+00> : vector<16x128xf32>
    %9 = tpu.matmul %7, %8, %cst_5 {dimension_numbers = #tpu.dot_dimension_numbers<[1], [0], [0], [1], [0, 0, 1, 1], [], []>} : vector<16x64xf32>, vector<64x128xf32>, vector<16x128xf32> -> vector<16x128xf32>
    %c0_6 = arith.constant 0 : index
    %c0_7 = arith.constant 0 : index
    %10 = vector.load %arg3[%c0_6, %c0_7] : memref<16x128xf32, #tpu.memory_space<vmem>>, vector<16x128xf32>
    tpu.vector_store %arg3[%c0_6, %c0_7], %9 {strides = array<i32>} : memref<16x128xf32, #tpu.memory_space<vmem>>, vector<16x128xf32>,
    return
  }
  func.func @transform_0(%arg0: i32) -> (i32, i32, i32) {
    %c0_i32 = arith.constant 0 : i32
    %c0_i32_0 = arith.constant 0 : i32
    %c0_i32_1 = arith.constant 0 : i32
    return %arg0, %c0_i32, %c0_i32_0 : i32, i32, i32
  }
  func.func @transform_1(%arg0: i32) -> (i32, i32) {
    %c0_i32 = arith.constant 0 : i32
    %c0_i32_0 = arith.constant 0 : i32
    %c0_i32_1 = arith.constant 0 : i32
    return %c0_i32, %c0_i32_0 : i32, i32
  }
  func.func @transform_2(%arg0: i32) -> (i32, i32) {
    %c0_i32 = arith.constant 0 : i32
    %c0_i32_0 = arith.constant 0 : i32
    return %arg0, %c0_i32 : i32, i32
  }
}

</mosaic_0001>

<llo_original>
// kernel: tpu_custom_call.1
$region0: #{tpu_custom_call.1}
  #allocation0 [shape = 'u32[]', space=smem, size = 0x4, offset = 0x4, fixed_abs, tag = 'smem constant byte address 0x4 - core index']
  #allocation1 [shape = 'u32[144,128]{1,0:T(1,128)}', space=vmem, size = 0x12000, scoped, tag = 'internal scratch']
  %s0 = inlined_call_operand.vmem [shape: s32[1,16,1], index: 0, kind: input, shape index: {}]
  %s1 = inlined_call_operand.hbm [shape: f32[64,128], index: 1, kind: input, shape index: {}]
  %s2 = inlined_call_operand.hbm [shape: f32[16,128], index: 2, kind: output, shape index: {}]
  %s3 = sld [smem:[#allocation0]]
  $region22: #{tpu_custom_call.1} parent=0
    _
  %s5 = ssub.s32 1, %s3
  %s6 = scalar_select 0, %s5, %s3
  $region1: #{tpu_custom_call.1} parent=0
    #allocation2 [shape = 'u8[32768]{0}', space=vmem, size = 0x8000, scoped, tag = 'input window, operand 1, single buffered']
    #allocation3 [shape = 's32[1]{0}', space=sflag, size = 0x4, scoped, tag = 'scoped memory for tpu_custom_call.1']
    #allocation4 [shape = 's32[1]{0}', space=sflag, size = 0x4, scoped, tag = 'scoped memory for tpu_custom_call.1']
    #allocation5 [shape = 'u8[8192]{0}', space=vmem, size = 0x2000, scoped, tag = 'output window, operand 0, single buffered']
    %7 = vsyncpa [#allocation3], 0
    %8 = vsyncpa [#allocation4], 0
    // Predicated region
    $region2: #{tpu_custom_call.1} parent=1 // pred_check
      _
    $region3: #{tpu_custom_call.1} parent=1 // pred_check_branch
      %10 = sbr.rel (0) target = $region5
    $region4: #{tpu_custom_call.1} parent=1 // pred_region
      _
    $region5: #{tpu_custom_call.1} parent=1 // pred_fallthru
      _
    // Predicated region
    $region6: #{tpu_custom_call.1} parent=1 // pred_check
      _
    $region7: #{tpu_custom_call.1} parent=1 // pred_check_branch
      %12 = sbr.rel (0) target = $region9
    $region8: #{tpu_custom_call.1} parent=1 // pred_region
      %s14 = ssub.s32 1024, 1024
      %15 = vsyncadd [#allocation3], %s14
      %s16 = sshll.u32 [#allocation2], 4
      %s17 = int_to_ptr.vmem [resolvable:$true] %s16
      %22 = dma.hbm_to_vmem [thread:$0]  %s1, 1024, %s17, [#allocation3], 128, 128, 8
    $region9: #{tpu_custom_call.1} parent=1 // pred_fallthru
      _
    // Predicated region
    $region10: #{tpu_custom_call.1} parent=1 // pred_check
      _
    $region11: #{tpu_custom_call.1} parent=1 // pred_check_branch
      %24 = sbr.rel (0) target = $region13
    $region12: #{tpu_custom_call.1} parent=1 // pred_region
      %25 = dma.done [#allocation3], 1024
    $region13: #{tpu_custom_call.1} parent=1 // pred_fallthru
      _
    %v26 = vld [vmem:[%s0] sm:$0xff]
    %v27 = vld [vmem:[%s0 + $0x8] sm:$0xff]
    %v28 = vlaneseq
    %v29 = vand.u32 %v28, 127
    %30 = vset.pattern.permute.xlu0 0
    %31 = vperm.xlu0 %30, %v26
    %v32 = vpop.permute.xlu0 %31
    %33 = vset.pattern.permute.xlu0 0
    %34 = vperm.xlu0 %33, %v27
    %v35 = vpop.permute.xlu0 %34
    %vm36 = vcmp.eq.s32.totalorder %v29, %v32
    %vm37 = vcmp.eq.s32.totalorder %v29, %v35
    %v38 = vsel %vm36, 11.313708, 0.0
    %v39 = vsel %vm37, 11.313708, 0.0
    %v40 = vld [vmem:[#allocation2] sm:$0xff]
    %v41 = vld [vmem:[#allocation2 + $0x8] sm:$0xff]
    %v42 = vld [vmem:[#allocation2 + $0x10] sm:$0xff]
    %v43 = vld [vmem:[#allocation2 + $0x18] sm:$0xff]
    %v44 = vld [vmem:[#allocation2 + $0x20] sm:$0xff]
    %v45 = vld [vmem:[#allocation2 + $0x28] sm:$0xff]
    %v46 = vld [vmem:[#allocation2 + $0x30] sm:$0xff]
    %v47 = vld [vmem:[#allocation2 + $0x38] sm:$0xff]
    %vm48 = vcmask 523264
    %v50 = vsel %vm48, %v38, 0
    %v53 = vsel %vm48, %v39, 0
    %55 = vmatprep.subr.mxu0 0.0
    %56 = vmatpush1.msra.mxu0 %v40
    %57 = vmatprep.subr.mxu0 0.0
    %58 = vmatpush1.msra.mxu0 %v41
    %59 = vmatprep.subr.mxu0 0.0
    %60 = vmatpush1.msra.mxu0 %v42
    %61 = vmatprep.subr.mxu0 0.0
    %62 = vmatpush1.msra.mxu0 %v43
    %63 = vmatprep.subr.mxu0 0.0
    %64 = vmatpush1.msra.mxu0 %v44
    %65 = vmatprep.subr.mxu0 0.0
    %66 = vmatpush1.msra.mxu0 %v45
    %67 = vmatprep.subr.mxu0 0.0
    %68 = vmatpush1.msra.mxu0 %v46
    %69 = vmatprep.subr.mxu0 0.0
    %70 = vmatpush1.msra.mxu0 %v47
    %71 = vmatprep.subr.mxu0 0.0
    %72 = vmatpush1.msra.mxu0 0.0
    %73 = vmatprep.subr.mxu0 0.0
    %74 = vmatpush1.msra.mxu0 0.0
    %75 = vmatprep.subr.mxu0 0.0
    %76 = vmatpush1.msra.mxu0 0.0
    %77 = vmatprep.subr.mxu0 0.0
    %78 = vmatpush1.msra.mxu0 0.0
    %79 = vmatprep.subr.mxu0 0.0
    %80 = vmatpush1.msra.mxu0 0.0
    %81 = vmatprep.subr.mxu0 0.0
    %82 = vmatpush1.msra.mxu0 0.0
    %83 = vmatprep.subr.mxu0 0.0
    %84 = vmatpush1.msra.mxu0 0.0
    %85 = vmatprep.subr.mxu0 0.0
    %86 = vmatpush1.msra.mxu0 0.0
    %87 = vmatprep.subr.mxu0 0.0
    %88 = vmatpush1.msra.mxu0 0.0
    %89 = vmatprep.subr.mxu0 0.0
    %90 = vmatpush1.msra.mxu0 0.0
    %91 = vmatprep.subr.mxu0 0.0
    %92 = vmatpush1.msra.mxu0 0.0
    %93 = vmatprep.subr.mxu0 0.0
    %94 = vmatpush1.msra.mxu0 0.0
    %95 = vmatprep.subr.mxu0 0.0
    %96 = vmatpush1.msra.mxu0 0.0
    %97 = vmatprep.subr.mxu0 0.0
    %98 = vmatpush1.msra.mxu0 0.0
    %99 = vmatprep.subr.mxu0 0.0
    %100 = vmatpush1.msra.mxu0 0.0
    %101 = vmatprep.subr.mxu0 0.0
    %102 = vmatpush1.msra.mxu0 0.0
    %103 = vmatprep.subr.mxu0 0.0
    %104 = vmatpush1.msra.mxu0 0.0
    %105 = vmatprep.subr.mxu0 0.0
    %106 = vmatpush1.msra.mxu0 0.0
    %107 = vmatprep.subr.mxu0 0.0
    %108 = vmatpush1.msra.mxu0 0.0
    %109 = vmatprep.subr.mxu0 0.0
    %110 = vmatpush1.msra.mxu0 0.0
    %111 = vmatprep.subr.mxu0 0.0
    %112 = vmatpush1.msra.mxu0 0.0
    %113 = vmatprep.subr.mxu0 0.0
    %114 = vmatpush1.msra.mxu0 0.0
    %115 = vmatprep.subr.mxu0 0.0
    %116 = vmatpush1.msra.mxu0 0.0
    %117 = vmatprep.subr.mxu0 0.0
    %118 = vmatpush1.msra.mxu0 0.0
    %119 = vmatprep.mubr.f32.mxu0 0.0
    %120 = vmatmul.mubr.f32.gmra.mrb[0].mxu0 %v50
    %v121 = vpop.f32.mrb[0].mxu0
    %v122 = vadd.f32 0.0, %v121
    %v123 = vpop.f32.mrb[0].mxu0
    %124 = vmatprep.mubr.f32.mxu0 0.0
    %125 = vmatmul.mubr.f32.gmra.mrb[0].mxu0 %v53
    %v126 = vpop.f32.mrb[0].mxu0
    %v127 = vadd.f32 0.0, %v126
    %v128 = vpop.f32.mrb[0].mxu0
    %129 = vdwg.mxu0
    %130 = vst [vmem:[#allocation5] sm:$0xff] %v122
    %131 = vst [vmem:[#allocation5 + $0x8] sm:$0xff] %v127
    // Predicated region
    $region14: #{tpu_custom_call.1} parent=1 // pred_check
      _
    $region15: #{tpu_custom_call.1} parent=1 // pred_check_branch
      %133 = sbr.rel (0) target = $region17
    $region16: #{tpu_custom_call.1} parent=1 // pred_region
      %s135 = ssub.s32 256, 256
      %136 = vsyncadd [#allocation4], %s135
      %s137 = sshll.u32 [#allocation5], 4
      %s138 = int_to_ptr.vmem [resolvable:$true] %s137
      %143 = dma.vmem_to_hbm [thread:$0]  %s138, 256, %s2, [#allocation4], 128, 128, 8
    $region17: #{tpu_custom_call.1} parent=1 // pred_fallthru
      _
    // Predicated region
    $region18: #{tpu_custom_call.1} parent=1 // pred_check
      _
    $region19: #{tpu_custom_call.1} parent=1 // pred_check_branch
      %145 = sbr.rel (0) target = $region21
    $region20: #{tpu_custom_call.1} parent=1 // pred_region
      %146 = dma.done [#allocation4], 256
    $region21: #{tpu_custom_call.1} parent=1 // pred_fallthru
      _
    %147 = vsyncpa [#allocation3], 1
    %148 = vsyncpa [#allocation4], 1

</llo_original>
